<compile_context>
chip_gen: v5e
topology: v5e:2x2
jax: 0.10.0
libtpu: 0.0.40
codegen_flags: <defaults>
</compile_context>

<pallas_src>
import jax
import jax.numpy as jnp
from jax.experimental import pallas as pl
from jax.experimental.pallas import tpu as pltpu


def _round_up(x, m):
    return ((x + m - 1) // m) * m


def _pick_tile(dim, candidates):
    for c in candidates:
        if dim % c == 0:
            return c
    return dim


# -----------------------------------------------------------------------------
# Kernel 1: the sequential recurrence.  Emits hidden states only (batch-first);
#           the time-independent output projection is hoisted to kernel 2.
# -----------------------------------------------------------------------------
def rnn_recurrence_kernel(x_ref, wih_ref, whh_ref, bh_ref, h_out_ref, h_carry_ref):
    """One (batch-tile, time-chunk) block of the recurrence.

    x_ref      : (T, Bt, Ep)   embedded inputs (time-major within the chunk), MXU dtype
    wih_ref    : (Ep, Hp)      W_ih^T  (constant across the grid)
    whh_ref    : (Hp, Hp)      W_hh^T  (constant across the grid)
    bh_ref     : (1, Hp)       b_ih + b_hh, f32
    h_out_ref  : (Bt, T, Hp)   hidden states (f32), written batch-first
    h_carry_ref: (Bt, Hp) f32  VMEM scratch carrying h across time chunks
    """
    # Time axis restarts at 0 whenever a new batch tile begins -> reset the carry.
    @pl.when(pl.program_id(1) == 0)
    def _():
        h_carry_ref[...] = jnp.zeros_like(h_carry_ref)

    w_dtype = wih_ref.dtype
    h = h_carry_ref[...]                                  # (Bt, Hp) f32

    T = x_ref.shape[0]
    # Statically unrolled inner loop over the time chunk (T is small and fixed).
    for t in range(T):
        x_t = x_ref[t]                                    # (Bt, Ep), MXU dtype
        pre = (jnp.dot(x_t, wih_ref[...], preferred_element_type=jnp.float32)
               + jnp.dot(h.astype(w_dtype), whh_ref[...],
                         preferred_element_type=jnp.float32)
               + bh_ref[...])                             # f32
        h = jnp.tanh(pre)                                 # f32 elementwise (VPU/EUP)
        h_out_ref[:, t, :] = h                            # batch-first f32 store

    h_carry_ref[...] = h


# -----------------------------------------------------------------------------
# Kernel 2: batched output projection over all (batch * time) rows at once.
# -----------------------------------------------------------------------------
def output_proj_kernel(h_ref, wo_ref, bo_ref, out_ref):
    """h_ref: (tm, Hp) f32, wo_ref: (Hp, tn) MXU dtype, bo_ref: (1, tn), out_ref: (tm, tn)."""
    h = h_ref[...].astype(wo_ref.dtype)
    out_ref[...] = (jnp.dot(h, wo_ref[...], preferred_element_type=jnp.float32)
                    + bo_ref[...]).astype(out_ref.dtype)


# -----------------------------------------------------------------------------
# Wrapper
# -----------------------------------------------------------------------------
def rnn_forward(x_ids, emb_table, w_ih, w_hh, b_ih, b_hh, w_out, b_out,
                *, mxu_dtype=jnp.float32):
    """Full forward pass.  x_ids: [B, S] int32 -> logits [B, S, V] (f32)."""
    B, S = x_ids.shape
    V, E = emb_table.shape
    H = w_hh.shape[0]
    f32 = jnp.float32

    # ---- hardware-friendly padded sizes -------------------------------------
    Bp = _round_up(B, 8)                       # sublane multiple (matmul M rows)
    Ep = _round_up(E, 128)                     # lane multiples
    Hp = _round_up(H, 128)
    Vp = _round_up(V, 128)                     # lane-dense output stores
    Sp = _round_up(S, 8)
    T = _pick_tile(Sp, (32, 16, 8))            # timesteps per grid step
    Bt = _pick_tile(Bp, (128, 64, 32, 16, 8))  # batch tile (parallel grid axis)

    # ---- glue: embedding gather directly in time-major + zero padding -------
    # TODO(synk): the embedding gather is a data-dependent HBM gather; kept in plain JAX.
    emb_p = jnp.pad(emb_table.astype(f32), ((0, 0), (0, Ep - E)))
    x_tm = jnp.take(emb_p, x_ids.T, axis=0)                       # (S, B, Ep)
    x_tm = jnp.pad(x_tm, ((0, Sp - S), (0, Bp - B), (0, 0))).astype(mxu_dtype)

    wih_t = jnp.pad(w_ih.T.astype(f32), ((0, Ep - E), (0, Hp - H))).astype(mxu_dtype)
    whh_t = jnp.pad(w_hh.T.astype(f32), ((0, Hp - H), (0, Hp - H))).astype(mxu_dtype)
    bh = jnp.pad((b_ih + b_hh).astype(f32), (0, Hp - H)).reshape(1, Hp)
    wo_t = jnp.pad(w_out.T.astype(f32), ((0, Hp - H), (0, Vp - V))).astype(mxu_dtype)
    bo = jnp.pad(b_out.astype(f32), (0, Vp - V)).reshape(1, Vp)

    # ---- kernel 1: recurrence -> hidden states (batch-first, f32) -----------
    hidden = pl.pallas_call(
        rnn_recurrence_kernel,
        out_shape=jax.ShapeDtypeStruct((Bp, Sp, Hp), f32),
        grid_spec=pltpu.PrefetchScalarGridSpec(
            num_scalar_prefetch=0,
            grid=(Bp // Bt, Sp // T),                # (parallel batch, sequential time)
            in_specs=[
                pl.BlockSpec((T, Bt, Ep), lambda b, c: (c, b, 0)),   # x chunk
                pl.BlockSpec((Ep, Hp), lambda b, c: (0, 0)),         # W_ih^T
                pl.BlockSpec((Hp, Hp), lambda b, c: (0, 0)),         # W_hh^T
                pl.BlockSpec((1, Hp), lambda b, c: (0, 0)),          # b_ih + b_hh
            ],
            out_specs=pl.BlockSpec((Bt, T, Hp), lambda b, c: (b, c, 0)),
            scratch_shapes=[pltpu.VMEM((Bt, Hp), jnp.float32)],      # hidden carry
        ),
        compiler_params=pltpu.CompilerParams(
            dimension_semantics=("parallel", "arbitrary"),
        ),
    )(x_tm, wih_t, whh_t, bh)

    # ---- kernel 2: hoisted output projection, one big tiled matmul ----------
    M = Bp * Sp
    h2d = hidden.reshape(M, Hp)                      # free reshape (contiguous)
    tm = _pick_tile(M, (512, 256, 128, 64, 32, 16, 8))
    tn = _pick_tile(Vp, (512, 256, 128))

    logits = pl.pallas_call(
        output_proj_kernel,
        out_shape=jax.ShapeDtypeStruct((M, Vp), jnp.float32),
        grid_spec=pltpu.PrefetchScalarGridSpec(
            num_scalar_prefetch=0,
            grid=(M // tm, Vp // tn),
            in_specs=[
                pl.BlockSpec((tm, Hp), lambda i, j: (i, 0)),         # hidden rows
                pl.BlockSpec((Hp, tn), lambda i, j: (0, j)),         # W_out^T tile
                pl.BlockSpec((1, tn), lambda i, j: (0, j)),          # b_out tile
            ],
            out_specs=pl.BlockSpec((tm, tn), lambda i, j: (i, j)),
        ),
        compiler_params=pltpu.CompilerParams(
            dimension_semantics=("parallel", "parallel"),
        ),
    )(h2d, wo_t, bo)

    # Batch-first already; just strip the padding.
    return logits.reshape(Bp, Sp, Vp)[:B, :S, :V]


def rnn_forward_ref(x_ids, emb_table, w_ih, w_hh, b_ih, b_hh, w_out, b_out):
    """Pure-JAX reference (lax.scan) for correctness checking."""
    emb = jnp.take(emb_table, x_ids, axis=0)          # [B, S, E]
    x_tm = jnp.transpose(emb, (1, 0, 2))              # [S, B, E]
    H = w_hh.shape[0]
    B = x_ids.shape[0]

    def step(h, x_t):
        h_new = jnp.tanh(x_t @ w_ih.T + b_ih + h @ w_hh.T + b_hh)
        return h_new, h_new

    h0 = jnp.zeros((B, H), jnp.float32)
    _, hs = jax.lax.scan(step, h0, x_tm)               # [S, B, H]
    logits = hs @ w_out.T + b_out                      # [S, B, V]
    return jnp.transpose(logits, (1, 0, 2))            # [B, S, V]


if __name__ == "__main__":
    # Small deterministic config consistent with the module's __init__:
    B, S = 2, 8          # batch_size, sequence length
    E = 32               # embedding_size
    H = 32               # RNN hidden_size
    V = 64               # vocab_size
    padding_idx = 0

    key = jax.random.PRNGKey(0)
    ks = jax.random.split(key, 8)

    emb_table = jax.random.normal(ks[0], (V, E), jnp.float32) * 0.1
    # nn.Embedding zeroes the padding_idx row.
    emb_table = emb_table.at[padding_idx].set(0.0)

    bound_rnn = 1.0 / jnp.sqrt(H)
    w_ih = jax.random.uniform(ks[1], (H, E), jnp.float32, -bound_rnn, bound_rnn)
    w_hh = jax.random.uniform(ks[2], (H, H), jnp.float32, -bound_rnn, bound_rnn)
    b_ih = jax.random.uniform(ks[3], (H,), jnp.float32, -bound_rnn, bound_rnn)
    b_hh = jax.random.uniform(ks[4], (H,), jnp.float32, -bound_rnn, bound_rnn)

    bound_out = 1.0 / jnp.sqrt(H)
    w_out = jax.random.uniform(ks[5], (V, H), jnp.float32, -bound_out, bound_out)
    b_out = jax.random.uniform(ks[6], (V,), jnp.float32, -bound_out, bound_out)

    x_ids = jax.random.randint(ks[7], (B, S), 0, V, dtype=jnp.int32)

    ref = rnn_forward_ref(x_ids, emb_table, w_ih, w_hh, b_ih, b_hh, w_out, b_out)

    # f32 MXU path.
    out = rnn_forward(x_ids, emb_table, w_ih, w_hh, b_ih, b_hh, w_out, b_out,
                      mxu_dtype=jnp.float32)
    out = jax.block_until_ready(out)
    assert out.shape == (B, S, V), out.shape
    assert jnp.allclose(out, ref, atol=2e-3, rtol=2e-3), "f32 mismatch vs JAX reference"

    # bf16 MXU-operand path (v6e/v7x-oriented; f32 accumulate + f32 tanh/bias/carry).
    out_bf16 = rnn_forward(x_ids, emb_table, w_ih, w_hh, b_ih, b_hh, w_out, b_out,
                           mxu_dtype=jnp.bfloat16)
    out_bf16 = jax.block_until_ready(out_bf16)
    assert out_bf16.shape == (B, S, V), out_bf16.shape
    assert jnp.allclose(out_bf16, ref, atol=6e-2, rtol=6e-2), "bf16 mismatch vs reference"

    print("KERNEL_OK")
</pallas_src>

<mosaic_0001>
module attributes {stable_mosaic.version = 11 : i64} {
  func.func @rnn_recurrence_kernel(%arg0: i32, %arg1: i32, %arg2: memref<8x8x128xf32, #tpu.memory_space<vmem>>, %arg3: memref<128x128xf32, #tpu.memory_space<vmem>>, %arg4: memref<128x128xf32, #tpu.memory_space<vmem>>, %arg5: memref<1x128xf32, #tpu.memory_space<vmem>>, %arg6: memref<8x8x128xf32, #tpu.memory_space<vmem>>, %arg7: memref<8x128xf32, #tpu.memory_space<vmem>>) attributes {dimension_semantics = [#tpu.dimension_semantics<parallel>, #tpu.dimension_semantics<arbitrary>], iteration_bounds = array<i64: 1, 1>, scalar_prefetch = 0 : i64, scratch_operands = 1 : i64, tpu.core_type = #tpu.core_type<tc>, window_params = [{transform_indices = @transform_0, window_bounds = array<i64: 8, 8, 128>}, {pipeline_mode = #tpu.pipeline_mode<synchronous>, transform_indices = @transform_1, window_bounds = array<i64: 128, 128>}, {pipeline_mode = #tpu.pipeline_mode<synchronous>, transform_indices = @transform_2, window_bounds = array<i64: 128, 128>}, {pipeline_mode = #tpu.pipeline_mode<synchronous>, transform_indices = @transform_3, window_bounds = array<i64: 1, 128>}, {transform_indices = @transform_4, window_bounds = array<i64: 8, 8, 128>}]} {
    %c0_i32 = arith.constant 0 : i32
    %0 = arith.cmpi eq, %arg1, %c0_i32 : i32
    %1 = arith.extui %0 : i1 to i32
    %c0_i32_0 = arith.constant 0 : i32
    %2 = arith.cmpi ne, %1, %c0_i32_0 : i32
    scf.if %2 {
      %cst_108 = arith.constant 0.000000e+00 : f32
      %117 = vector.broadcast %cst_108 : f32 to vector<8x128xf32>
      %c0_109 = arith.constant 0 : index
      %c0_110 = arith.constant 0 : index
      %118 = vector.load %arg7[%c0_109, %c0_110] : memref<8x128xf32, #tpu.memory_space<vmem>>, vector<8x128xf32>
      tpu.vector_store %arg7[%c0_109, %c0_110], %117 {strides = array<i32>} : memref<8x128xf32, #tpu.memory_space<vmem>>, vector<8x128xf32>,
    } else {
    }
    %c0 = arith.constant 0 : index
    %c0_1 = arith.constant 0 : index
    %3 = vector.load %arg7[%c0, %c0_1] : memref<8x128xf32, #tpu.memory_space<vmem>>, vector<8x128xf32>
    %c0_2 = arith.constant 0 : index
    %c0_3 = arith.constant 0 : index
    %c0_4 = arith.constant 0 : index
    %4 = vector.load %arg2[%c0_2, %c0_3, %c0_4] : memref<8x8x128xf32, #tpu.memory_space<vmem>>, vector<1x8x128xf32>
    %5 = vector.shape_cast %4 : vector<1x8x128xf32> to vector<8x128xf32>
    %c0_5 = arith.constant 0 : index
    %c0_6 = arith.constant 0 : index
    %6 = vector.load %arg3[%c0_5, %c0_6] : memref<128x128xf32, #tpu.memory_space<vmem>>, vector<128x128xf32>
    %cst = arith.constant dense<0.000000e+00> : vector<8x128xf32>
    %7 = tpu.matmul %5, %6, %cst {dimension_numbers = #tpu.dot_dimension_numbers<[1], [0], [0], [1], [0, 0, 1, 1], [], []>} : vector<8x128xf32>, vector<128x128xf32>, vector<8x128xf32> -> vector<8x128xf32>
    %c0_7 = arith.constant 0 : index
    %c0_8 = arith.constant 0 : index
    %8 = vector.load %arg4[%c0_7, %c0_8] : memref<128x128xf32, #tpu.memory_space<vmem>>, vector<128x128xf32>
    %cst_9 = arith.constant dense<0.000000e+00> : vector<8x128xf32>
    %9 = tpu.matmul %3, %8, %cst_9 {dimension_numbers = #tpu.dot_dimension_numbers<[1], [0], [0], [1], [0, 0, 1, 1], [], []>} : vector<8x128xf32>, vector<128x128xf32>, vector<8x128xf32> -> vector<8x128xf32>
    %10 = arith.addf %7, %9 : vector<8x128xf32>
    %c0_10 = arith.constant 0 : index
    %c0_11 = arith.constant 0 : index
    %11 = vector.load %arg5[%c0_10, %c0_11] : memref<1x128xf32, #tpu.memory_space<vmem>>, vector<1x128xf32>
    %12 = vector.broadcast %11 : vector<1x128xf32> to vector<8x128xf32>
    %13 = arith.addf %10, %12 : vector<8x128xf32>
    %14 = math.tanh %13 : vector<8x128xf32>
    %c0_12 = arith.constant 0 : index
    %c0_13 = arith.constant 0 : index
    %c0_14 = arith.constant 0 : index
    %15 = vector.load %arg6[%c0_12, %c0_13, %c0_14] : memref<8x8x128xf32, #tpu.memory_space<vmem>>, vector<8x1x128xf32>
    %16 = vector.shape_cast %15 : vector<8x1x128xf32> to vector<8x128xf32>
    %17 = vector.shape_cast %14 : vector<8x128xf32> to vector<8x1x128xf32>
    tpu.vector_store %arg6[%c0_12, %c0_13, %c0_14], %17 {strides = array<i32>} : memref<8x8x128xf32, #tpu.memory_space<vmem>>, vector<8x1x128xf32>,
    %c1 = arith.constant 1 : index
    %c0_15 = arith.constant 0 : index
    %c0_16 = arith.constant 0 : index
    %18 = vector.load %arg2[%c1, %c0_15, %c0_16] : memref<8x8x128xf32, #tpu.memory_space<vmem>>, vector<1x8x128xf32>
    %19 = vector.shape_cast %18 : vector<1x8x128xf32> to vector<8x128xf32>
    %c0_17 = arith.constant 0 : index
    %c0_18 = arith.constant 0 : index
    %20 = vector.load %arg3[%c0_17, %c0_18] : memref<128x128xf32, #tpu.memory_space<vmem>>, vector<128x128xf32>
    %cst_19 = arith.constant dense<0.000000e+00> : vector<8x128xf32>
    %21 = tpu.matmul %19, %20, %cst_19 {dimension_numbers = #tpu.dot_dimension_numbers<[1], [0], [0], [1], [0, 0, 1, 1], [], []>} : vector<8x128xf32>, vector<128x128xf32>, vector<8x128xf32> -> vector<8x128xf32>
    %c0_20 = arith.constant 0 : index
    %c0_21 = arith.constant 0 : index
    %22 = vector.load %arg4[%c0_20, %c0_21] : memref<128x128xf32, #tpu.memory_space<vmem>>, vector<128x128xf32>
    %cst_22 = arith.constant dense<0.000000e+00> : vector<8x128xf32>
    %23 = tpu.matmul %14, %22, %cst_22 {dimension_numbers = #tpu.dot_dimension_numbers<[1], [0], [0], [1], [0, 0, 1, 1], [], []>} : vector<8x128xf32>, vector<128x128xf32>, vector<8x128xf32> -> vector<8x128xf32>
    %24 = arith.addf %21, %23 : vector<8x128xf32>
    %c0_23 = arith.constant 0 : index
    %c0_24 = arith.constant 0 : index
    %25 = vector.load %arg5[%c0_23, %c0_24] : memref<1x128xf32, #tpu.memory_space<vmem>>, vector<1x128xf32>
    %26 = vector.broadcast %25 : vector<1x128xf32> to vector<8x128xf32>
    %27 = arith.addf %24, %26 : vector<8x128xf32>
    %28 = math.tanh %27 : vector<8x128xf32>
    %c0_25 = arith.constant 0 : index
    %c1_26 = arith.constant 1 : index
    %c0_27 = arith.constant 0 : index
    %29 = vector.load %arg6[%c0_25, %c1_26, %c0_27] : memref<8x8x128xf32, #tpu.memory_space<vmem>>, vector<8x1x128xf32>
    %30 = vector.shape_cast %29 : vector<8x1x128xf32> to vector<8x128xf32>
    %31 = vector.shape_cast %28 : vector<8x128xf32> to vector<8x1x128xf32>
    tpu.vector_store %arg6[%c0_25, %c1_26, %c0_27], %31 {strides = array<i32>} : memref<8x8x128xf32, #tpu.memory_space<vmem>>, vector<8x1x128xf32>,
    %c2 = arith.constant 2 : index
    %c0_28 = arith.constant 0 : index
    %c0_29 = arith.constant 0 : index
    %32 = vector.load %arg2[%c2, %c0_28, %c0_29] : memref<8x8x128xf32, #tpu.memory_space<vmem>>, vector<1x8x128xf32>
    %33 = vector.shape_cast %32 : vector<1x8x128xf32> to vector<8x128xf32>
    %c0_30 = arith.constant 0 : index
    %c0_31 = arith.constant 0 : index
    %34 = vector.load %arg3[%c0_30, %c0_31] : memref<128x128xf32, #tpu.memory_space<vmem>>, vector<128x128xf32>
    %cst_32 = arith.constant dense<0.000000e+00> : vector<8x128xf32>
    %35 = tpu.matmul %33, %34, %cst_32 {dimension_numbers = #tpu.dot_dimension_numbers<[1], [0], [0], [1], [0, 0, 1, 1], [], []>} : vector<8x128xf32>, vector<128x128xf32>, vector<8x128xf32> -> vector<8x128xf32>
    %c0_33 = arith.constant 0 : index
    %c0_34 = arith.constant 0 : index
    %36 = vector.load %arg4[%c0_33, %c0_34] : memref<128x128xf32, #tpu.memory_space<vmem>>, vector<128x128xf32>
    %cst_35 = arith.constant dense<0.000000e+00> : vector<8x128xf32>
    %37 = tpu.matmul %28, %36, %cst_35 {dimension_numbers = #tpu.dot_dimension_numbers<[1], [0], [0], [1], [0, 0, 1, 1], [], []>} : vector<8x128xf32>, vector<128x128xf32>, vector<8x128xf32> -> vector<8x128xf32>
    %38 = arith.addf %35, %37 : vector<8x128xf32>
    %c0_36 = arith.constant 0 : index
    %c0_37 = arith.constant 0 : index
    %39 = vector.load %arg5[%c0_36, %c0_37] : memref<1x128xf32, #tpu.memory_space<vmem>>, vector<1x128xf32>
    %40 = vector.broadcast %39 : vector<1x128xf32> to vector<8x128xf32>
    %41 = arith.addf %38, %40 : vector<8x128xf32>
    %42 = math.tanh %41 : vector<8x128xf32>
    %c0_38 = arith.constant 0 : index
    %c2_39 = arith.constant 2 : index
    %c0_40 = arith.constant 0 : index
    %43 = vector.load %arg6[%c0_38, %c2_39, %c0_40] : memref<8x8x128xf32, #tpu.memory_space<vmem>>, vector<8x1x128xf32>
    %44 = vector.shape_cast %43 : vector<8x1x128xf32> to vector<8x128xf32>
    %45 = vector.shape_cast %42 : vector<8x128xf32> to vector<8x1x128xf32>
    tpu.vector_store %arg6[%c0_38, %c2_39, %c0_40], %45 {strides = array<i32>} : memref<8x8x128xf32, #tpu.memory_space<vmem>>, vector<8x1x128xf32>,
    %c3 = arith.constant 3 : index
    %c0_41 = arith.constant 0 : index
    %c0_42 = arith.constant 0 : index
    %46 = vector.load %arg2[%c3, %c0_41, %c0_42] : memref<8x8x128xf32, #tpu.memory_space<vmem>>, vector<1x8x128xf32>
    %47 = vector.shape_cast %46 : vector<1x8x128xf32> to vector<8x128xf32>
    %c0_43 = arith.constant 0 : index
    %c0_44 = arith.constant 0 : index
    %48 = vector.load %arg3[%c0_43, %c0_44] : memref<128x128xf32, #tpu.memory_space<vmem>>, vector<128x128xf32>
    %cst_45 = arith.constant dense<0.000000e+00> : vector<8x128xf32>
    %49 = tpu.matmul %47, %48, %cst_45 {dimension_numbers = #tpu.dot_dimension_numbers<[1], [0], [0], [1], [0, 0, 1, 1], [], []>} : vector<8x128xf32>, vector<128x128xf32>, vector<8x128xf32> -> vector<8x128xf32>
    %c0_46 = arith.constant 0 : index
    %c0_47 = arith.constant 0 : index
    %50 = vector.load %arg4[%c0_46, %c0_47] : memref<128x128xf32, #tpu.memory_space<vmem>>, vector<128x128xf32>
    %cst_48 = arith.constant dense<0.000000e+00> : vector<8x128xf32>
    %51 = tpu.matmul %42, %50, %cst_48 {dimension_numbers = #tpu.dot_dimension_numbers<[1], [0], [0], [1], [0, 0, 1, 1], [], []>} : vector<8x128xf32>, vector<128x128xf32>, vector<8x128xf32> -> vector<8x128xf32>
    %52 = arith.addf %49, %51 : vector<8x128xf32>
    %c0_49 = arith.constant 0 : index
    %c0_50 = arith.constant 0 : index
    %53 = vector.load %arg5[%c0_49, %c0_50] : memref<1x128xf32, #tpu.memory_space<vmem>>, vector<1x128xf32>
    %54 = vector.broadcast %53 : vector<1x128xf32> to vector<8x128xf32>
    %55 = arith.addf %52, %54 : vector<8x128xf32>
    %56 = math.tanh %55 : vector<8x128xf32>
    %c0_51 = arith.constant 0 : index
    %c3_52 = arith.constant 3 : index
    %c0_53 = arith.constant 0 : index
    %57 = vector.load %arg6[%c0_51, %c3_52, %c0_53] : memref<8x8x128xf32, #tpu.memory_space<vmem>>, vector<8x1x128xf32>
    %58 = vector.shape_cast %57 : vector<8x1x128xf32> to vector<8x128xf32>
    %59 = vector.shape_cast %56 : vector<8x128xf32> to vector<8x1x128xf32>
    tpu.vector_store %arg6[%c0_51, %c3_52, %c0_53], %59 {strides = array<i32>} : memref<8x8x128xf32, #tpu.memory_space<vmem>>, vector<8x1x128xf32>,
    %c4 = arith.constant 4 : index
    %c0_54 = arith.constant 0 : index
    %c0_55 = arith.constant 0 : index
    %60 = vector.load %arg2[%c4, %c0_54, %c0_55] : memref<8x8x128xf32, #tpu.memory_space<vmem>>, vector<1x8x128xf32>
    %61 = vector.shape_cast %60 : vector<1x8x128xf32> to vector<8x128xf32>
    %c0_56 = arith.constant 0 : index
    %c0_57 = arith.constant 0 : index
    %62 = vector.load %arg3[%c0_56, %c0_57] : memref<128x128xf32, #tpu.memory_space<vmem>>, vector<128x128xf32>
    %cst_58 = arith.constant dense<0.000000e+00> : vector<8x128xf32>
    %63 = tpu.matmul %61, %62, %cst_58 {dimension_numbers = #tpu.dot_dimension_numbers<[1], [0], [0], [1], [0, 0, 1, 1], [], []>} : vector<8x128xf32>, vector<128x128xf32>, vector<8x128xf32> -> vector<8x128xf32>
    %c0_59 = arith.constant 0 : index
    %c0_60 = arith.constant 0 : index
    %64 = vector.load %arg4[%c0_59, %c0_60] : memref<128x128xf32, #tpu.memory_space<vmem>>, vector<128x128xf32>
    %cst_61 = arith.constant dense<0.000000e+00> : vector<8x128xf32>
    %65 = tpu.matmul %56, %64, %cst_61 {dimension_numbers = #tpu.dot_dimension_numbers<[1], [0], [0], [1], [0, 0, 1, 1], [], []>} : vector<8x128xf32>, vector<128x128xf32>, vector<8x128xf32> -> vector<8x128xf32>
    %66 = arith.addf %63, %65 : vector<8x128xf32>
    %c0_62 = arith.constant 0 : index
    %c0_63 = arith.constant 0 : index
    %67 = vector.load %arg5[%c0_62, %c0_63] : memref<1x128xf32, #tpu.memory_space<vmem>>, vector<1x128xf32>
    %68 = vector.broadcast %67 : vector<1x128xf32> to vector<8x128xf32>
    %69 = arith.addf %66, %68 : vector<8x128xf32>
    %70 = math.tanh %69 : vector<8x128xf32>
    %c0_64 = arith.constant 0 : index
    %c4_65 = arith.constant 4 : index
    %c0_66 = arith.constant 0 : index
    %71 = vector.load %arg6[%c0_64, %c4_65, %c0_66] : memref<8x8x128xf32, #tpu.memory_space<vmem>>, vector<8x1x128xf32>
    %72 = vector.shape_cast %71 : vector<8x1x128xf32> to vector<8x128xf32>
    %73 = vector.shape_cast %70 : vector<8x128xf32> to vector<8x1x128xf32>
    tpu.vector_store %arg6[%c0_64, %c4_65, %c0_66], %73 {strides = array<i32>} : memref<8x8x128xf32, #tpu.memory_space<vmem>>, vector<8x1x128xf32>,
    %c5 = arith.constant 5 : index
    %c0_67 = arith.constant 0 : index
    %c0_68 = arith.constant 0 : index
    %74 = vector.load %arg2[%c5, %c0_67, %c0_68] : memref<8x8x128xf32, #tpu.memory_space<vmem>>, vector<1x8x128xf32>
    %75 = vector.shape_cast %74 : vector<1x8x128xf32> to vector<8x128xf32>
    %c0_69 = arith.constant 0 : index
    %c0_70 = arith.constant 0 : index
    %76 = vector.load %arg3[%c0_69, %c0_70] : memref<128x128xf32, #tpu.memory_space<vmem>>, vector<128x128xf32>
    %cst_71 = arith.constant dense<0.000000e+00> : vector<8x128xf32>
    %77 = tpu.matmul %75, %76, %cst_71 {dimension_numbers = #tpu.dot_dimension_numbers<[1], [0], [0], [1], [0, 0, 1, 1], [], []>} : vector<8x128xf32>, vector<128x128xf32>, vector<8x128xf32> -> vector<8x128xf32>
    %c0_72 = arith.constant 0 : index
    %c0_73 = arith.constant 0 : index
    %78 = vector.load %arg4[%c0_72, %c0_73] : memref<128x128xf32, #tpu.memory_space<vmem>>, vector<128x128xf32>
    %cst_74 = arith.constant dense<0.000000e+00> : vector<8x128xf32>
    %79 = tpu.matmul %70, %78, %cst_74 {dimension_numbers = #tpu.dot_dimension_numbers<[1], [0], [0], [1], [0, 0, 1, 1], [], []>} : vector<8x128xf32>, vector<128x128xf32>, vector<8x128xf32> -> vector<8x128xf32>
    %80 = arith.addf %77, %79 : vector<8x128xf32>
    %c0_75 = arith.constant 0 : index
    %c0_76 = arith.constant 0 : index
    %81 = vector.load %arg5[%c0_75, %c0_76] : memref<1x128xf32, #tpu.memory_space<vmem>>, vector<1x128xf32>
    %82 = vector.broadcast %81 : vector<1x128xf32> to vector<8x128xf32>
    %83 = arith.addf %80, %82 : vector<8x128xf32>
    %84 = math.tanh %83 : vector<8x128xf32>
    %c0_77 = arith.constant 0 : index
    %c5_78 = arith.constant 5 : index
    %c0_79 = arith.constant 0 : index
    %85 = vector.load %arg6[%c0_77, %c5_78, %c0_79] : memref<8x8x128xf32, #tpu.memory_space<vmem>>, vector<8x1x128xf32>
    %86 = vector.shape_cast %85 : vector<8x1x128xf32> to vector<8x128xf32>
    %87 = vector.shape_cast %84 : vector<8x128xf32> to vector<8x1x128xf32>
    tpu.vector_store %arg6[%c0_77, %c5_78, %c0_79], %87 {strides = array<i32>} : memref<8x8x128xf32, #tpu.memory_space<vmem>>, vector<8x1x128xf32>,
    %c6 = arith.constant 6 : index
    %c0_80 = arith.constant 0 : index
    %c0_81 = arith.constant 0 : index
    %88 = vector.load %arg2[%c6, %c0_80, %c0_81] : memref<8x8x128xf32, #tpu.memory_space<vmem>>, vector<1x8x128xf32>
    %89 = vector.shape_cast %88 : vector<1x8x128xf32> to vector<8x128xf32>
    %c0_82 = arith.constant 0 : index
    %c0_83 = arith.constant 0 : index
    %90 = vector.load %arg3[%c0_82, %c0_83] : memref<128x128xf32, #tpu.memory_space<vmem>>, vector<128x128xf32>
    %cst_84 = arith.constant dense<0.000000e+00> : vector<8x128xf32>
    %91 = tpu.matmul %89, %90, %cst_84 {dimension_numbers = #tpu.dot_dimension_numbers<[1], [0], [0], [1], [0, 0, 1, 1], [], []>} : vector<8x128xf32>, vector<128x128xf32>, vector<8x128xf32> -> vector<8x128xf32>
    %c0_85 = arith.constant 0 : index
    %c0_86 = arith.constant 0 : index
    %92 = vector.load %arg4[%c0_85, %c0_86] : memref<128x128xf32, #tpu.memory_space<vmem>>, vector<128x128xf32>
    %cst_87 = arith.constant dense<0.000000e+00> : vector<8x128xf32>
    %93 = tpu.matmul %84, %92, %cst_87 {dimension_numbers = #tpu.dot_dimension_numbers<[1], [0], [0], [1], [0, 0, 1, 1], [], []>} : vector<8x128xf32>, vector<128x128xf32>, vector<8x128xf32> -> vector<8x128xf32>
    %94 = arith.addf %91, %93 : vector<8x128xf32>
    %c0_88 = arith.constant 0 : index
    %c0_89 = arith.constant 0 : index
    %95 = vector.load %arg5[%c0_88, %c0_89] : memref<1x128xf32, #tpu.memory_space<vmem>>, vector<1x128xf32>
    %96 = vector.broadcast %95 : vector<1x128xf32> to vector<8x128xf32>
    %97 = arith.addf %94, %96 : vector<8x128xf32>
    %98 = math.tanh %97 : vector<8x128xf32>
    %c0_90 = arith.constant 0 : index
    %c6_91 = arith.constant 6 : index
    %c0_92 = arith.constant 0 : index
    %99 = vector.load %arg6[%c0_90, %c6_91, %c0_92] : memref<8x8x128xf32, #tpu.memory_space<vmem>>, vector<8x1x128xf32>
    %100 = vector.shape_cast %99 : vector<8x1x128xf32> to vector<8x128xf32>
    %101 = vector.shape_cast %98 : vector<8x128xf32> to vector<8x1x128xf32>
    tpu.vector_store %arg6[%c0_90, %c6_91, %c0_92], %101 {strides = array<i32>} : memref<8x8x128xf32, #tpu.memory_space<vmem>>, vector<8x1x128xf32>,
    %c7 = arith.constant 7 : index
    %c0_93 = arith.constant 0 : index
    %c0_94 = arith.constant 0 : index
    %102 = vector.load %arg2[%c7, %c0_93, %c0_94] : memref<8x8x128xf32, #tpu.memory_space<vmem>>, vector<1x8x128xf32>
    %103 = vector.shape_cast %102 : vector<1x8x128xf32> to vector<8x128xf32>
    %c0_95 = arith.constant 0 : index
    %c0_96 = arith.constant 0 : index
    %104 = vector.load %arg3[%c0_95, %c0_96] : memref<128x128xf32, #tpu.memory_space<vmem>>, vector<128x128xf32>
    %cst_97 = arith.constant dense<0.000000e+00> : vector<8x128xf32>
    %105 = tpu.matmul %103, %104, %cst_97 {dimension_numbers = #tpu.dot_dimension_numbers<[1], [0], [0], [1], [0, 0, 1, 1], [], []>} : vector<8x128xf32>, vector<128x128xf32>, vector<8x128xf32> -> vector<8x128xf32>
    %c0_98 = arith.constant 0 : index
    %c0_99 = arith.constant 0 : index
    %106 = vector.load %arg4[%c0_98, %c0_99] : memref<128x128xf32, #tpu.memory_space<vmem>>, vector<128x128xf32>
    %cst_100 = arith.constant dense<0.000000e+00> : vector<8x128xf32>
    %107 = tpu.matmul %98, %106, %cst_100 {dimension_numbers = #tpu.dot_dimension_numbers<[1], [0], [0], [1], [0, 0, 1, 1], [], []>} : vector<8x128xf32>, vector<128x128xf32>, vector<8x128xf32> -> vector<8x128xf32>
    %108 = arith.addf %105, %107 : vector<8x128xf32>
    %c0_101 = arith.constant 0 : index
    %c0_102 = arith.constant 0 : index
    %109 = vector.load %arg5[%c0_101, %c0_102] : memref<1x128xf32, #tpu.memory_space<vmem>>, vector<1x128xf32>
    %110 = vector.broadcast %109 : vector<1x128xf32> to vector<8x128xf32>
    %111 = arith.addf %108, %110 : vector<8x128xf32>
    %112 = math.tanh %111 : vector<8x128xf32>
    %c0_103 = arith.constant 0 : index
    %c7_104 = arith.constant 7 : index
    %c0_105 = arith.constant 0 : index
    %113 = vector.load %arg6[%c0_103, %c7_104, %c0_105] : memref<8x8x128xf32, #tpu.memory_space<vmem>>, vector<8x1x128xf32>
    %114 = vector.shape_cast %113 : vector<8x1x128xf32> to vector<8x128xf32>
    %115 = vector.shape_cast %112 : vector<8x128xf32> to vector<8x1x128xf32>
    tpu.vector_store %arg6[%c0_103, %c7_104, %c0_105], %115 {strides = array<i32>} : memref<8x8x128xf32, #tpu.memory_space<vmem>>, vector<8x1x128xf32>,
    %c0_106 = arith.constant 0 : index
    %c0_107 = arith.constant 0 : index
    %116 = vector.load %arg7[%c0_106, %c0_107] : memref<8x128xf32, #tpu.memory_space<vmem>>, vector<8x128xf32>
    tpu.vector_store %arg7[%c0_106, %c0_107], %112 {strides = array<i32>} : memref<8x128xf32, #tpu.memory_space<vmem>>, vector<8x128xf32>,
    return
  }
  func.func @transform_0(%arg0: i32, %arg1: i32) -> (i32, i32, i32) {
    %c0_i32 = arith.constant 0 : i32
    %c0_i32_0 = arith.constant 0 : i32
    return %arg1, %arg0, %c0_i32 : i32, i32, i32
  }
  func.func @transform_1(%arg0: i32, %arg1: i32) -> (i32, i32) {
    %c0_i32 = arith.constant 0 : i32
    %c0_i32_0 = arith.constant 0 : i32
    %c0_i32_1 = arith.constant 0 : i32
    return %c0_i32, %c0_i32_0 : i32, i32
  }
  func.func @transform_2(%arg0: i32, %arg1: i32) -> (i32, i32) {
    %c0_i32 = arith.constant 0 : i32
    %c0_i32_0 = arith.constant 0 : i32
    %c0_i32_1 = arith.constant 0 : i32
    return %c0_i32, %c0_i32_0 : i32, i32
  }
  func.func @transform_3(%arg0: i32, %arg1: i32) -> (i32, i32) {
    %c0_i32 = arith.constant 0 : i32
    %c0_i32_0 = arith.constant 0 : i32
    %c0_i32_1 = arith.constant 0 : i32
    return %c0_i32, %c0_i32_0 : i32, i32
  }
  func.func @transform_4(%arg0: i32, %arg1: i32) -> (i32, i32, i32) {
    %c0_i32 = arith.constant 0 : i32
    %c0_i32_0 = arith.constant 0 : i32
    return %arg0, %arg1, %c0_i32 : i32, i32, i32
  }
}

</mosaic_0001>

<llo_original>
// kernel: tpu_custom_call.1
$region0: #{tpu_custom_call.1}
  #allocation0 [shape = 'u32[]', space=smem, size = 0x4, offset = 0x4, fixed_abs, tag = 'smem constant byte address 0x4 - core index']
  #allocation1 [shape = 'u32[72,128]{1,0:T(1,128)}', space=vmem, size = 0x9000, scoped, tag = 'internal scratch']
  #allocation2 [shape = 'f32[8,128]{1,0:T(8,128)}', space=vmem, size = 0x1000, scoped, tag = 'scratch operand']
  %s0 = inlined_call_operand.hbm [shape: f32[8,8,128], index: 0, kind: input, shape index: {}]
  %s1 = inlined_call_operand.hbm [shape: f32[128,128], index: 1, kind: input, shape index: {}]
  %s2 = inlined_call_operand.hbm [shape: f32[128,128], index: 2, kind: input, shape index: {}]
  %s3 = inlined_call_operand.vmem [shape: f32[1,128], index: 3, kind: input, shape index: {}]
  %s4 = inlined_call_operand.hbm [shape: f32[8,8,128], index: 4, kind: output, shape index: {}]
  %s5 = sld [smem:[#allocation0]]
  $region42: #{tpu_custom_call.1} parent=0
    _
  %s7 = ssub.s32 1, %s5
  %s8 = scalar_select 0, %s7, %s5
  $region1: #{tpu_custom_call.1} parent=0
    #allocation3 [shape = 'u8[32768]{0}', space=vmem, size = 0x8000, scoped, tag = 'input window, operand 0, single buffered']
    #allocation4 [shape = 's32[1]{0}', space=sflag, size = 0x4, scoped, tag = 'scoped memory for tpu_custom_call.1']
    #allocation5 [shape = 's32[1]{0}', space=sflag, size = 0x4, scoped, tag = 'scoped memory for tpu_custom_call.1']
    #allocation6 [shape = 'u8[65536]{0}', space=vmem, size = 0x10000, scoped, tag = 'input window, operand 1, single buffered']
    #allocation7 [shape = 's32[1]{0}', space=sflag, size = 0x4, scoped, tag = 'scoped memory for tpu_custom_call.1']
    #allocation8 [shape = 'u8[65536]{0}', space=vmem, size = 0x10000, scoped, tag = 'input window, operand 2, single buffered']
    #allocation9 [shape = 'u8[32768]{0}', space=vmem, size = 0x8000, scoped, tag = 'output window, operand 0, single buffered']
    %9 = vsyncpa [#allocation4], 0
    %10 = vsyncpa [#allocation7], 0
    %11 = vsyncpa [#allocation5], 0
    // Predicated region
    $region2: #{tpu_custom_call.1} parent=1 // pred_check
      _
    $region3: #{tpu_custom_call.1} parent=1 // pred_check_branch
      %13 = sbr.rel (0) target = $region5
    $region4: #{tpu_custom_call.1} parent=1 // pred_region
      %15 = vsyncadd [#allocation4], 0
      %s16 = sshll.u32 %s0, 4
      %s17 = int_to_ptr.hbm [resolvable:$true] %s16
      %s18 = sshll.u32 [#allocation3], 4
      %s19 = int_to_ptr.vmem [resolvable:$true] %s18
      %24 = dma.hbm_to_vmem [thread:$0]  %s17, 1024, %s19, [#allocation4], 128, 128, 8
    $region5: #{tpu_custom_call.1} parent=1 // pred_fallthru
      _
    // Predicated region
    $region6: #{tpu_custom_call.1} parent=1 // pred_check
      _
    $region7: #{tpu_custom_call.1} parent=1 // pred_check_branch
      %26 = sbr.rel (0) target = $region9
    $region8: #{tpu_custom_call.1} parent=1 // pred_region
      %28 = vsyncadd [#allocation7], 0
      %s29 = sshll.u32 %s1, 4
      %s30 = int_to_ptr.hbm [resolvable:$true] %s29
      %s31 = sshll.u32 [#allocation6], 4
      %s32 = int_to_ptr.vmem [resolvable:$true] %s31
      %37 = dma.hbm_to_vmem [thread:$0]  %s30, 2048, %s32, [#allocation7], 128, 128, 8
    $region9: #{tpu_custom_call.1} parent=1 // pred_fallthru
      _
    // Predicated region
    $region10: #{tpu_custom_call.1} parent=1 // pred_check
      _
    $region11: #{tpu_custom_call.1} parent=1 // pred_check_branch
      %39 = sbr.rel (0) target = $region13
    $region12: #{tpu_custom_call.1} parent=1 // pred_region
      %41 = vsyncadd [#allocation7], 0
      %s42 = sshll.u32 %s2, 4
      %s43 = int_to_ptr.hbm [resolvable:$true] %s42
      %s44 = sshll.u32 [#allocation8], 4
      %s45 = int_to_ptr.vmem [resolvable:$true] %s44
      %50 = dma.hbm_to_vmem [thread:$0]  %s43, 2048, %s45, [#allocation7], 128, 128, 8
    $region13: #{tpu_custom_call.1} parent=1 // pred_fallthru
      _
    // Predicated region
    $region14: #{tpu_custom_call.1} parent=1 // pred_check
      _
    $region15: #{tpu_custom_call.1} parent=1 // pred_check_branch
      %52 = sbr.rel (0) target = $region17
    $region16: #{tpu_custom_call.1} parent=1 // pred_region
      _
    $region17: #{tpu_custom_call.1} parent=1 // pred_fallthru
      _
    // Predicated region
    $region18: #{tpu_custom_call.1} parent=1 // pred_check
      _
    $region19: #{tpu_custom_call.1} parent=1 // pred_check_branch
      %54 = sbr.rel (0) target = $region21
    $region20: #{tpu_custom_call.1} parent=1 // pred_region
      %56 = dma.done [#allocation4], 1024
    $region21: #{tpu_custom_call.1} parent=1 // pred_fallthru
      _
    // Predicated region
    $region22: #{tpu_custom_call.1} parent=1 // pred_check
      _
    $region23: #{tpu_custom_call.1} parent=1 // pred_check_branch
      %58 = sbr.rel (0) target = $region25
    $region24: #{tpu_custom_call.1} parent=1 // pred_region
      %60 = dma.done [#allocation7], 2048
    $region25: #{tpu_custom_call.1} parent=1 // pred_fallthru
      _
    // Predicated region
    $region26: #{tpu_custom_call.1} parent=1 // pred_check
      _
    $region27: #{tpu_custom_call.1} parent=1 // pred_check_branch
      %62 = sbr.rel (0) target = $region29
    $region28: #{tpu_custom_call.1} parent=1 // pred_region
      %64 = dma.done [#allocation7], 2048
    $region29: #{tpu_custom_call.1} parent=1 // pred_fallthru
      _
    %p65 = scmp.eq.s32.totalorder 0, 0
    // Predicated region
    $region30: #{tpu_custom_call.1} parent=1 // pred_check
      %p66 = pneg %p65
    $region31: #{tpu_custom_call.1} parent=1 // pred_check_branch
      %68 = sbr.rel (%p66) target = $region33
    $region32: #{tpu_custom_call.1} parent=1 // pred_region
      %69 = vst [vmem:[#allocation2] sm:$0xff] 0.0
    $region33: #{tpu_custom_call.1} parent=1 // pred_fallthru
      _
    %v70 = vld [vmem:[#allocation2] sm:$0xff]
    %v71 = vld [vmem:[#allocation3] sm:$0xff]
    %v72 = vld [vmem:[#allocation6] sm:$0xff]
    %v73 = vld [vmem:[#allocation6 + $0x8] sm:$0xff]
    %v74 = vld [vmem:[#allocation6 + $0x10] sm:$0xff]
    %v75 = vld [vmem:[#allocation6 + $0x18] sm:$0xff]
    %v76 = vld [vmem:[#allocation6 + $0x20] sm:$0xff]
    %v77 = vld [vmem:[#allocation6 + $0x28] sm:$0xff]
    %v78 = vld [vmem:[#allocation6 + $0x30] sm:$0xff]
    %v79 = vld [vmem:[#allocation6 + $0x38] sm:$0xff]
    %v80 = vld [vmem:[#allocation6 + $0x40] sm:$0xff]
    %v81 = vld [vmem:[#allocation6 + $0x48] sm:$0xff]
    %v82 = vld [vmem:[#allocation6 + $0x50] sm:$0xff]
    %v83 = vld [vmem:[#allocation6 + $0x58] sm:$0xff]
    %v84 = vld [vmem:[#allocation6 + $0x60] sm:$0xff]
    %v85 = vld [vmem:[#allocation6 + $0x68] sm:$0xff]
    %v86 = vld [vmem:[#allocation6 + $0x70] sm:$0xff]
    %v87 = vld [vmem:[#allocation6 + $0x78] sm:$0xff]
    %v88 = vld [vmem:[#allocation8] sm:$0xff]
    %v89 = vld [vmem:[#allocation8 + $0x8] sm:$0xff]
    %v90 = vld [vmem:[#allocation8 + $0x10] sm:$0xff]
    %v91 = vld [vmem:[#allocation8 + $0x18] sm:$0xff]
    %v92 = vld [vmem:[#allocation8 + $0x20] sm:$0xff]
    %v93 = vld [vmem:[#allocation8 + $0x28] sm:$0xff]
    %v94 = vld [vmem:[#allocation8 + $0x30] sm:$0xff]
    %v95 = vld [vmem:[#allocation8 + $0x38] sm:$0xff]
    %v96 = vld [vmem:[#allocation8 + $0x40] sm:$0xff]
    %v97 = vld [vmem:[#allocation8 + $0x48] sm:$0xff]
    %v98 = vld [vmem:[#allocation8 + $0x50] sm:$0xff]
    %v99 = vld [vmem:[#allocation8 + $0x58] sm:$0xff]
    %v100 = vld [vmem:[#allocation8 + $0x60] sm:$0xff]
    %v101 = vld [vmem:[#allocation8 + $0x68] sm:$0xff]
    %v102 = vld [vmem:[#allocation8 + $0x70] sm:$0xff]
    %v103 = vld [vmem:[#allocation8 + $0x78] sm:$0xff]
    %104 = vmatpush.msra.mxu0 %v103
    %105 = vmatpush.msra.mxu0 %v102
    %106 = vmatpush.msra.mxu0 %v101
    %107 = vmatpush.msra.mxu0 %v100
    %108 = vmatpush.msra.mxu0 %v99
    %109 = vmatpush.msra.mxu0 %v98
    %110 = vmatpush.msra.mxu0 %v97
    %111 = vmatpush.msra.mxu0 %v96
    %112 = vmatpush.msra.mxu0 %v95
    %113 = vmatpush.msra.mxu0 %v94
    %114 = vmatpush.msra.mxu0 %v93
    %115 = vmatpush.msra.mxu0 %v92
    %116 = vmatpush.msra.mxu0 %v91
    %117 = vmatpush.msra.mxu0 %v90
    %118 = vmatpush.msra.mxu0 %v89
    %119 = vmatpush.msra.mxu0 %v88
    %120 = vmatmul.f32.gmra.mxu0 %v70
    %v121 = vpop.f32.mrf.mxu0
    %v122 = vadd.f32 0.0, %v121
    %123 = vdwg.mxu0
    %124 = vmatpush.msra.mxu0 %v87
    %125 = vmatpush.msra.mxu0 %v86
    %126 = vmatpush.msra.mxu0 %v85
    %127 = vmatpush.msra.mxu0 %v84
    %128 = vmatpush.msra.mxu0 %v83
    %129 = vmatpush.msra.mxu0 %v82
    %130 = vmatpush.msra.mxu0 %v81
    %131 = vmatpush.msra.mxu0 %v80
    %132 = vmatpush.msra.mxu0 %v79
    %133 = vmatpush.msra.mxu0 %v78
    %134 = vmatpush.msra.mxu0 %v77
    %135 = vmatpush.msra.mxu0 %v76
    %136 = vmatpush.msra.mxu0 %v75
    %137 = vmatpush.msra.mxu0 %v74
    %138 = vmatpush.msra.mxu0 %v73
    %139 = vmatpush.msra.mxu0 %v72
    %140 = vmatmul.f32.gmra.mxu0 %v71
    %v141 = vpop.f32.mrf.mxu0
    %v142 = vadd.f32 %v122, %v141
    %143 = vdwg.mxu0
    %v144 = vld [vmem:[%s3] sm:$0x1]
    %v146 = vperm.slane %v144, 0
    %v148 = vadd.f32 %v142, %v146
    %v149 = vtanh.pop %v148
    %v151 = vrot.slane %v149, 1
    %v152 = vrot.slane %v149, 2
    %v153 = vrot.slane %v149, 3
    %v154 = vrot.slane %v149, 4
    %v155 = vrot.slane %v149, 5
    %v156 = vrot.slane %v149, 6
    %v157 = vrot.slane %v149, 7
    %165 = vst [vmem:[#allocation9] sm:$0x1] %v149
    %166 = vst [vmem:[#allocation9 + $0x8] sm:$0x1] %v151
    %167 = vst [vmem:[#allocation9 + $0x10] sm:$0x1] %v152
    %168 = vst [vmem:[#allocation9 + $0x18] sm:$0x1] %v153
    %169 = vst [vmem:[#allocation9 + $0x20] sm:$0x1] %v154
    %170 = vst [vmem:[#allocation9 + $0x28] sm:$0x1] %v155
    %171 = vst [vmem:[#allocation9 + $0x30] sm:$0x1] %v156
    %172 = vst [vmem:[#allocation9 + $0x38] sm:$0x1] %v157
    %s173 = scalar_lea.vmem [#allocation3], 8
    %v174 = vld [vmem:[%s173] sm:$0xff]
    %v175 = vld [vmem:[#allocation6] sm:$0xff]
    %v176 = vld [vmem:[#allocation6 + $0x8] sm:$0xff]
    %v177 = vld [vmem:[#allocation6 + $0x10] sm:$0xff]
    %v178 = vld [vmem:[#allocation6 + $0x18] sm:$0xff]
    %v179 = vld [vmem:[#allocation6 + $0x20] sm:$0xff]
    %v180 = vld [vmem:[#allocation6 + $0x28] sm:$0xff]
    %v181 = vld [vmem:[#allocation6 + $0x30] sm:$0xff]
    %v182 = vld [vmem:[#allocation6 + $0x38] sm:$0xff]
    %v183 = vld [vmem:[#allocation6 + $0x40] sm:$0xff]
    %v184 = vld [vmem:[#allocation6 + $0x48] sm:$0xff]
    %v185 = vld [vmem:[#allocation6 + $0x50] sm:$0xff]
    %v186 = vld [vmem:[#allocation6 + $0x58] sm:$0xff]
    %v187 = vld [vmem:[#allocation6 + $0x60] sm:$0xff]
    %v188 = vld [vmem:[#allocation6 + $0x68] sm:$0xff]
    %v189 = vld [vmem:[#allocation6 + $0x70] sm:$0xff]
    %v190 = vld [vmem:[#allocation6 + $0x78] sm:$0xff]
    %v191 = vld [vmem:[#allocation8] sm:$0xff]
    %v192 = vld [vmem:[#allocation8 + $0x8] sm:$0xff]
    %v193 = vld [vmem:[#allocation8 + $0x10] sm:$0xff]
    %v194 = vld [vmem:[#allocation8 + $0x18] sm:$0xff]
    %v195 = vld [vmem:[#allocation8 + $0x20] sm:$0xff]
    %v196 = vld [vmem:[#allocation8 + $0x28] sm:$0xff]
    %v197 = vld [vmem:[#allocation8 + $0x30] sm:$0xff]
    %v198 = vld [vmem:[#allocation8 + $0x38] sm:$0xff]
    %v199 = vld [vmem:[#allocation8 + $0x40] sm:$0xff]
    %v200 = vld [vmem:[#allocation8 + $0x48] sm:$0xff]
    %v201 = vld [vmem:[#allocation8 + $0x50] sm:$0xff]
    %v202 = vld [vmem:[#allocation8 + $0x58] sm:$0xff]
    %v203 = vld [vmem:[#allocation8 + $0x60] sm:$0xff]
    %v204 = vld [vmem:[#allocation8 + $0x68] sm:$0xff]
    %v205 = vld [vmem:[#allocation8 + $0x70] sm:$0xff]
    %v206 = vld [vmem:[#allocation8 + $0x78] sm:$0xff]
    %207 = vmatpush.msra.mxu0 %v206
    %208 = vmatpush.msra.mxu0 %v205
    %209 = vmatpush.msra.mxu0 %v204
    %210 = vmatpush.msra.mxu0 %v203
    %211 = vmatpush.msra.mxu0 %v202
    %212 = vmatpush.msra.mxu0 %v201
    %213 = vmatpush.msra.mxu0 %v200
    %214 = vmatpush.msra.mxu0 %v199
    %215 = vmatpush.msra.mxu0 %v198
    %216 = vmatpush.msra.mxu0 %v197
    %217 = vmatpush.msra.mxu0 %v196
    %218 = vmatpush.msra.mxu0 %v195
    %219 = vmatpush.msra.mxu0 %v194
    %220 = vmatpush.msra.mxu0 %v193
    %221 = vmatpush.msra.mxu0 %v192
    %222 = vmatpush.msra.mxu0 %v191
    %223 = vmatmul.f32.gmra.mxu0 %v149
    %v224 = vpop.f32.mrf.mxu0
    %v225 = vadd.f32 0.0, %v224
    %226 = vdwg.mxu0
    %227 = vmatpush.msra.mxu0 %v190
    %228 = vmatpush.msra.mxu0 %v189
    %229 = vmatpush.msra.mxu0 %v188
    %230 = vmatpush.msra.mxu0 %v187
    %231 = vmatpush.msra.mxu0 %v186
    %232 = vmatpush.msra.mxu0 %v185
    %233 = vmatpush.msra.mxu0 %v184
    %234 = vmatpush.msra.mxu0 %v183
    %235 = vmatpush.msra.mxu0 %v182
    %236 = vmatpush.msra.mxu0 %v181
    %237 = vmatpush.msra.mxu0 %v180
    %238 = vmatpush.msra.mxu0 %v179
    %239 = vmatpush.msra.mxu0 %v178
    %240 = vmatpush.msra.mxu0 %v177
    %241 = vmatpush.msra.mxu0 %v176
    %242 = vmatpush.msra.mxu0 %v175
    %243 = vmatmul.f32.gmra.mxu0 %v174
    %v244 = vpop.f32.mrf.mxu0
    %v245 = vadd.f32 %v225, %v244
    %246 = vdwg.mxu0
    %v247 = vld [vmem:[%s3] sm:$0x1]
    %v249 = vperm.slane %v247, 0
    %v251 = vadd.f32 %v245, %v249
    %v252 = vtanh.pop %v251
    %v254 = vrot.slane %v252, 1
    %v255 = vrot.slane %v252, 2
    %v256 = vrot.slane %v252, 3
    %v257 = vrot.slane %v252, 4
    %v258 = vrot.slane %v252, 5
    %v259 = vrot.slane %v252, 6
    %v260 = vrot.slane %v252, 7
    %268 = vst [vmem:[#allocation9 + $0x1] sm:$0x1] %v252
    %269 = vst [vmem:[#allocation9 + $0x9] sm:$0x1] %v254
    %270 = vst [vmem:[#allocation9 + $0x11] sm:$0x1] %v255
    %271 = vst [vmem:[#allocation9 + $0x19] sm:$0x1] %v256
    %272 = vst [vmem:[#allocation9 + $0x21] sm:$0x1] %v257
    %273 = vst [vmem:[#allocation9 + $0x29] sm:$0x1] %v258
    %274 = vst [vmem:[#allocation9 + $0x31] sm:$0x1] %v259
    %275 = vst [vmem:[#allocation9 + $0x39] sm:$0x1] %v260
    %s276 = scalar_lea.vmem [#allocation3], 16
    %v277 = vld [vmem:[%s276] sm:$0xff]
    %v278 = vld [vmem:[#allocation6] sm:$0xff]
    %v279 = vld [vmem:[#allocation6 + $0x8] sm:$0xff]
    %v280 = vld [vmem:[#allocation6 + $0x10] sm:$0xff]
    %v281 = vld [vmem:[#allocation6 + $0x18] sm:$0xff]
    %v282 = vld [vmem:[#allocation6 + $0x20] sm:$0xff]
    %v283 = vld [vmem:[#allocation6 + $0x28] sm:$0xff]
    %v284 = vld [vmem:[#allocation6 + $0x30] sm:$0xff]
    %v285 = vld [vmem:[#allocation6 + $0x38] sm:$0xff]
    %v286 = vld [vmem:[#allocation6 + $0x40] sm:$0xff]
    %v287 = vld [vmem:[#allocation6 + $0x48] sm:$0xff]
    %v288 = vld [vmem:[#allocation6 + $0x50] sm:$0xff]
    %v289 = vld [vmem:[#allocation6 + $0x58] sm:$0xff]
    %v290 = vld [vmem:[#allocation6 + $0x60] sm:$0xff]
    %v291 = vld [vmem:[#allocation6 + $0x68] sm:$0xff]
    %v292 = vld [vmem:[#allocation6 + $0x70] sm:$0xff]
    %v293 = vld [vmem:[#allocation6 + $0x78] sm:$0xff]
    %v294 = vld [vmem:[#allocation8] sm:$0xff]
    %v295 = vld [vmem:[#allocation8 + $0x8] sm:$0xff]
    %v296 = vld [vmem:[#allocation8 + $0x10] sm:$0xff]
    %v297 = vld [vmem:[#allocation8 + $0x18] sm:$0xff]
    %v298 = vld [vmem:[#allocation8 + $0x20] sm:$0xff]
    %v299 = vld [vmem:[#allocation8 + $0x28] sm:$0xff]
    %v300 = vld [vmem:[#allocation8 + $0x30] sm:$0xff]
    %v301 = vld [vmem:[#allocation8 + $0x38] sm:$0xff]
    %v302 = vld [vmem:[#allocation8 + $0x40] sm:$0xff]
    %v303 = vld [vmem:[#allocation8 + $0x48] sm:$0xff]
    %v304 = vld [vmem:[#allocation8 + $0x50] sm:$0xff]
    %v305 = vld [vmem:[#allocation8 + $0x58] sm:$0xff]
    %v306 = vld [vmem:[#allocation8 + $0x60] sm:$0xff]
    %v307 = vld [vmem:[#allocation8 + $0x68] sm:$0xff]
    %v308 = vld [vmem:[#allocation8 + $0x70] sm:$0xff]
    %v309 = vld [vmem:[#allocation8 + $0x78] sm:$0xff]
    %310 = vmatpush.msra.mxu0 %v309
    %311 = vmatpush.msra.mxu0 %v308
    %312 = vmatpush.msra.mxu0 %v307
    %313 = vmatpush.msra.mxu0 %v306
    %314 = vmatpush.msra.mxu0 %v305
    %315 = vmatpush.msra.mxu0 %v304
    %316 = vmatpush.msra.mxu0 %v303
    %317 = vmatpush.msra.mxu0 %v302
    %318 = vmatpush.msra.mxu0 %v301
    %319 = vmatpush.msra.mxu0 %v300
    %320 = vmatpush.msra.mxu0 %v299
    %321 = vmatpush.msra.mxu0 %v298
    %322 = vmatpush.msra.mxu0 %v297
    %323 = vmatpush.msra.mxu0 %v296
    %324 = vmatpush.msra.mxu0 %v295
    %325 = vmatpush.msra.mxu0 %v294
    %326 = vmatmul.f32.gmra.mxu0 %v252
    %v327 = vpop.f32.mrf.mxu0
    %v328 = vadd.f32 0.0, %v327
    %329 = vdwg.mxu0
    %330 = vmatpush.msra.mxu0 %v293
    %331 = vmatpush.msra.mxu0 %v292
    %332 = vmatpush.msra.mxu0 %v291
    %333 = vmatpush.msra.mxu0 %v290
    %334 = vmatpush.msra.mxu0 %v289
    %335 = vmatpush.msra.mxu0 %v288
    %336 = vmatpush.msra.mxu0 %v287
    %337 = vmatpush.msra.mxu0 %v286
    %338 = vmatpush.msra.mxu0 %v285
    %339 = vmatpush.msra.mxu0 %v284
    %340 = vmatpush.msra.mxu0 %v283
    %341 = vmatpush.msra.mxu0 %v282
    %342 = vmatpush.msra.mxu0 %v281
    %343 = vmatpush.msra.mxu0 %v280
    %344 = vmatpush.msra.mxu0 %v279
    %345 = vmatpush.msra.mxu0 %v278
    %346 = vmatmul.f32.gmra.mxu0 %v277
    %v347 = vpop.f32.mrf.mxu0
    %v348 = vadd.f32 %v328, %v347
    %349 = vdwg.mxu0
    %v350 = vld [vmem:[%s3] sm:$0x1]
    %v352 = vperm.slane %v350, 0
    %v354 = vadd.f32 %v348, %v352
    %v355 = vtanh.pop %v354
    %v357 = vrot.slane %v355, 1
    %v358 = vrot.slane %v355, 2
    %v359 = vrot.slane %v355, 3
    %v360 = vrot.slane %v355, 4
    %v361 = vrot.slane %v355, 5
    %v362 = vrot.slane %v355, 6
    %v363 = vrot.slane %v355, 7
    %371 = vst [vmem:[#allocation9 + $0x2] sm:$0x1] %v355
    %372 = vst [vmem:[#allocation9 + $0xa] sm:$0x1] %v357
    %373 = vst [vmem:[#allocation9 + $0x12] sm:$0x1] %v358
    %374 = vst [vmem:[#allocation9 + $0x1a] sm:$0x1] %v359
    %375 = vst [vmem:[#allocation9 + $0x22] sm:$0x1] %v360
    %376 = vst [vmem:[#allocation9 + $0x2a] sm:$0x1] %v361
    %377 = vst [vmem:[#allocation9 + $0x32] sm:$0x1] %v362
    %378 = vst [vmem:[#allocation9 + $0x3a] sm:$0x1] %v363
    %s379 = scalar_lea.vmem [#allocation3], 24
    %v380 = vld [vmem:[%s379] sm:$0xff]
    %v381 = vld [vmem:[#allocation6] sm:$0xff]
    %v382 = vld [vmem:[#allocation6 + $0x8] sm:$0xff]
    %v383 = vld [vmem:[#allocation6 + $0x10] sm:$0xff]
    %v384 = vld [vmem:[#allocation6 + $0x18] sm:$0xff]
    %v385 = vld [vmem:[#allocation6 + $0x20] sm:$0xff]
    %v386 = vld [vmem:[#allocation6 + $0x28] sm:$0xff]
    %v387 = vld [vmem:[#allocation6 + $0x30] sm:$0xff]
    %v388 = vld [vmem:[#allocation6 + $0x38] sm:$0xff]
    %v389 = vld [vmem:[#allocation6 + $0x40] sm:$0xff]
    %v390 = vld [vmem:[#allocation6 + $0x48] sm:$0xff]
    %v391 = vld [vmem:[#allocation6 + $0x50] sm:$0xff]
    %v392 = vld [vmem:[#allocation6 + $0x58] sm:$0xff]
    %v393 = vld [vmem:[#allocation6 + $0x60] sm:$0xff]
    %v394 = vld [vmem:[#allocation6 + $0x68] sm:$0xff]
    %v395 = vld [vmem:[#allocation6 + $0x70] sm:$0xff]
    %v396 = vld [vmem:[#allocation6 + $0x78] sm:$0xff]
    %v397 = vld [vmem:[#allocation8] sm:$0xff]
    %v398 = vld [vmem:[#allocation8 + $0x8] sm:$0xff]
    %v399 = vld [vmem:[#allocation8 + $0x10] sm:$0xff]
    %v400 = vld [vmem:[#allocation8 + $0x18] sm:$0xff]
    %v401 = vld [vmem:[#allocation8 + $0x20] sm:$0xff]
    %v402 = vld [vmem:[#allocation8 + $0x28] sm:$0xff]
    %v403 = vld [vmem:[#allocation8 + $0x30] sm:$0xff]
    %v404 = vld [vmem:[#allocation8 + $0x38] sm:$0xff]
    %v405 = vld [vmem:[#allocation8 + $0x40] sm:$0xff]
    %v406 = vld [vmem:[#allocation8 + $0x48] sm:$0xff]
    %v407 = vld [vmem:[#allocation8 + $0x50] sm:$0xff]
    %v408 = vld [vmem:[#allocation8 + $0x58] sm:$0xff]
    %v409 = vld [vmem:[#allocation8 + $0x60] sm:$0xff]
    %v410 = vld [vmem:[#allocation8 + $0x68] sm:$0xff]
    %v411 = vld [vmem:[#allocation8 + $0x70] sm:$0xff]
    %v412 = vld [vmem:[#allocation8 + $0x78] sm:$0xff]
    %413 = vmatpush.msra.mxu0 %v412
    %414 = vmatpush.msra.mxu0 %v411
    %415 = vmatpush.msra.mxu0 %v410
    %416 = vmatpush.msra.mxu0 %v409
    %417 = vmatpush.msra.mxu0 %v408
    %418 = vmatpush.msra.mxu0 %v407
    %419 = vmatpush.msra.mxu0 %v406
    %420 = vmatpush.msra.mxu0 %v405
    %421 = vmatpush.msra.mxu0 %v404
    %422 = vmatpush.msra.mxu0 %v403
    %423 = vmatpush.msra.mxu0 %v402
    %424 = vmatpush.msra.mxu0 %v401
    %425 = vmatpush.msra.mxu0 %v400
    %426 = vmatpush.msra.mxu0 %v399
    %427 = vmatpush.msra.mxu0 %v398
    %428 = vmatpush.msra.mxu0 %v397
    %429 = vmatmul.f32.gmra.mxu0 %v355
    %v430 = vpop.f32.mrf.mxu0
    %v431 = vadd.f32 0.0, %v430
    %432 = vdwg.mxu0
    %433 = vmatpush.msra.mxu0 %v396
    %434 = vmatpush.msra.mxu0 %v395
    %435 = vmatpush.msra.mxu0 %v394
    %436 = vmatpush.msra.mxu0 %v393
    %437 = vmatpush.msra.mxu0 %v392
    %438 = vmatpush.msra.mxu0 %v391
    %439 = vmatpush.msra.mxu0 %v390
    %440 = vmatpush.msra.mxu0 %v389
    %441 = vmatpush.msra.mxu0 %v388
    %442 = vmatpush.msra.mxu0 %v387
    %443 = vmatpush.msra.mxu0 %v386
    %444 = vmatpush.msra.mxu0 %v385
    %445 = vmatpush.msra.mxu0 %v384
    %446 = vmatpush.msra.mxu0 %v383
    %447 = vmatpush.msra.mxu0 %v382
    %448 = vmatpush.msra.mxu0 %v381
    %449 = vmatmul.f32.gmra.mxu0 %v380
    %v450 = vpop.f32.mrf.mxu0
    %v451 = vadd.f32 %v431, %v450
    %452 = vdwg.mxu0
    %v453 = vld [vmem:[%s3] sm:$0x1]
    %v455 = vperm.slane %v453, 0
    %v457 = vadd.f32 %v451, %v455
    %v458 = vtanh.pop %v457
    %v460 = vrot.slane %v458, 1
    %v461 = vrot.slane %v458, 2
    %v462 = vrot.slane %v458, 3
    %v463 = vrot.slane %v458, 4
    %v464 = vrot.slane %v458, 5
    %v465 = vrot.slane %v458, 6
    %v466 = vrot.slane %v458, 7
    %474 = vst [vmem:[#allocation9 + $0x3] sm:$0x1] %v458
    %475 = vst [vmem:[#allocation9 + $0xb] sm:$0x1] %v460
    %476 = vst [vmem:[#allocation9 + $0x13] sm:$0x1] %v461
    %477 = vst [vmem:[#allocation9 + $0x1b] sm:$0x1] %v462
    %478 = vst [vmem:[#allocation9 + $0x23] sm:$0x1] %v463
    %479 = vst [vmem:[#allocation9 + $0x2b] sm:$0x1] %v464
    %480 = vst [vmem:[#allocation9 + $0x33] sm:$0x1] %v465
    %481 = vst [vmem:[#allocation9 + $0x3b] sm:$0x1] %v466
    %s482 = scalar_lea.vmem [#allocation3], 32
    %v483 = vld [vmem:[%s482] sm:$0xff]
    %v484 = vld [vmem:[#allocation6] sm:$0xff]
    %v485 = vld [vmem:[#allocation6 + $0x8] sm:$0xff]
    %v486 = vld [vmem:[#allocation6 + $0x10] sm:$0xff]
    %v487 = vld [vmem:[#allocation6 + $0x18] sm:$0xff]
    %v488 = vld [vmem:[#allocation6 + $0x20] sm:$0xff]
    %v489 = vld [vmem:[#allocation6 + $0x28] sm:$0xff]
    %v490 = vld [vmem:[#allocation6 + $0x30] sm:$0xff]
    %v491 = vld [vmem:[#allocation6 + $0x38] sm:$0xff]
    %v492 = vld [vmem:[#allocation6 + $0x40] sm:$0xff]
    %v493 = vld [vmem:[#allocation6 + $0x48] sm:$0xff]
    %v494 = vld [vmem:[#allocation6 + $0x50] sm:$0xff]
    %v495 = vld [vmem:[#allocation6 + $0x58] sm:$0xff]
    %v496 = vld [vmem:[#allocation6 + $0x60] sm:$0xff]
    %v497 = vld [vmem:[#allocation6 + $0x68] sm:$0xff]
    %v498 = vld [vmem:[#allocation6 + $0x70] sm:$0xff]
    %v499 = vld [vmem:[#allocation6 + $0x78] sm:$0xff]
    %v500 = vld [vmem:[#allocation8] sm:$0xff]
    %v501 = vld [vmem:[#allocation8 + $0x8] sm:$0xff]
    %v502 = vld [vmem:[#allocation8 + $0x10] sm:$0xff]
    %v503 = vld [vmem:[#allocation8 + $0x18] sm:$0xff]
    %v504 = vld [vmem:[#allocation8 + $0x20] sm:$0xff]
    %v505 = vld [vmem:[#allocation8 + $0x28] sm:$0xff]
    %v506 = vld [vmem:[#allocation8 + $0x30] sm:$0xff]
    %v507 = vld [vmem:[#allocation8 + $0x38] sm:$0xff]
    %v508 = vld [vmem:[#allocation8 + $0x40] sm:$0xff]
    %v509 = vld [vmem:[#allocation8 + $0x48] sm:$0xff]
    %v510 = vld [vmem:[#allocation8 + $0x50] sm:$0xff]
    %v511 = vld [vmem:[#allocation8 + $0x58] sm:$0xff]
    %v512 = vld [vmem:[#allocation8 + $0x60] sm:$0xff]
    %v513 = vld [vmem:[#allocation8 + $0x68] sm:$0xff]
    %v514 = vld [vmem:[#allocation8 + $0x70] sm:$0xff]
    %v515 = vld [vmem:[#allocation8 + $0x78] sm:$0xff]
    %516 = vmatpush.msra.mxu0 %v515
    %517 = vmatpush.msra.mxu0 %v514
    %518 = vmatpush.msra.mxu0 %v513
    %519 = vmatpush.msra.mxu0 %v512
    %520 = vmatpush.msra.mxu0 %v511
    %521 = vmatpush.msra.mxu0 %v510
    %522 = vmatpush.msra.mxu0 %v509
    %523 = vmatpush.msra.mxu0 %v508
    %524 = vmatpush.msra.mxu0 %v507
    %525 = vmatpush.msra.mxu0 %v506
    %526 = vmatpush.msra.mxu0 %v505
    %527 = vmatpush.msra.mxu0 %v504
    %528 = vmatpush.msra.mxu0 %v503
    %529 = vmatpush.msra.mxu0 %v502
    %530 = vmatpush.msra.mxu0 %v501
    %531 = vmatpush.msra.mxu0 %v500
    %532 = vmatmul.f32.gmra.mxu0 %v458
    %v533 = vpop.f32.mrf.mxu0
    %v534 = vadd.f32 0.0, %v533
    %535 = vdwg.mxu0
    %536 = vmatpush.msra.mxu0 %v499
    %537 = vmatpush.msra.mxu0 %v498
    %538 = vmatpush.msra.mxu0 %v497
    %539 = vmatpush.msra.mxu0 %v496
    %540 = vmatpush.msra.mxu0 %v495
    %541 = vmatpush.msra.mxu0 %v494
    %542 = vmatpush.msra.mxu0 %v493
    %543 = vmatpush.msra.mxu0 %v492
    %544 = vmatpush.msra.mxu0 %v491
    %545 = vmatpush.msra.mxu0 %v490
    %546 = vmatpush.msra.mxu0 %v489
    %547 = vmatpush.msra.mxu0 %v488
    %548 = vmatpush.msra.mxu0 %v487
    %549 = vmatpush.msra.mxu0 %v486
    %550 = vmatpush.msra.mxu0 %v485
    %551 = vmatpush.msra.mxu0 %v484
    %552 = vmatmul.f32.gmra.mxu0 %v483
    %v553 = vpop.f32.mrf.mxu0
    %v554 = vadd.f32 %v534, %v553
    %555 = vdwg.mxu0
    %v556 = vld [vmem:[%s3] sm:$0x1]
    %v558 = vperm.slane %v556, 0
    %v560 = vadd.f32 %v554, %v558
    %v561 = vtanh.pop %v560
    %v563 = vrot.slane %v561, 1
    %v564 = vrot.slane %v561, 2
    %v565 = vrot.slane %v561, 3
    %v566 = vrot.slane %v561, 4
    %v567 = vrot.slane %v561, 5
    %v568 = vrot.slane %v561, 6
    %v569 = vrot.slane %v561, 7
    %577 = vst [vmem:[#allocation9 + $0x4] sm:$0x1] %v561
    %578 = vst [vmem:[#allocation9 + $0xc] sm:$0x1] %v563
    %579 = vst [vmem:[#allocation9 + $0x14] sm:$0x1] %v564
    %580 = vst [vmem:[#allocation9 + $0x1c] sm:$0x1] %v565
    %581 = vst [vmem:[#allocation9 + $0x24] sm:$0x1] %v566
    %582 = vst [vmem:[#allocation9 + $0x2c] sm:$0x1] %v567
    %583 = vst [vmem:[#allocation9 + $0x34] sm:$0x1] %v568
    %584 = vst [vmem:[#allocation9 + $0x3c] sm:$0x1] %v569
    %s585 = scalar_lea.vmem [#allocation3], 40
    %v586 = vld [vmem:[%s585] sm:$0xff]
    %v587 = vld [vmem:[#allocation6] sm:$0xff]
    %v588 = vld [vmem:[#allocation6 + $0x8] sm:$0xff]
    %v589 = vld [vmem:[#allocation6 + $0x10] sm:$0xff]
    %v590 = vld [vmem:[#allocation6 + $0x18] sm:$0xff]
    %v591 = vld [vmem:[#allocation6 + $0x20] sm:$0xff]
    %v592 = vld [vmem:[#allocation6 + $0x28] sm:$0xff]
    %v593 = vld [vmem:[#allocation6 + $0x30] sm:$0xff]
    %v594 = vld [vmem:[#allocation6 + $0x38] sm:$0xff]
    %v595 = vld [vmem:[#allocation6 + $0x40] sm:$0xff]
    %v596 = vld [vmem:[#allocation6 + $0x48] sm:$0xff]
    %v597 = vld [vmem:[#allocation6 + $0x50] sm:$0xff]
    %v598 = vld [vmem:[#allocation6 + $0x58] sm:$0xff]
    %v599 = vld [vmem:[#allocation6 + $0x60] sm:$0xff]
    %v600 = vld [vmem:[#allocation6 + $0x68] sm:$0xff]
    %v601 = vld [vmem:[#allocation6 + $0x70] sm:$0xff]
    %v602 = vld [vmem:[#allocation6 + $0x78] sm:$0xff]
    %v603 = vld [vmem:[#allocation8] sm:$0xff]
    %v604 = vld [vmem:[#allocation8 + $0x8] sm:$0xff]
    %v605 = vld [vmem:[#allocation8 + $0x10] sm:$0xff]
    %v606 = vld [vmem:[#allocation8 + $0x18] sm:$0xff]
    %v607 = vld [vmem:[#allocation8 + $0x20] sm:$0xff]
    %v608 = vld [vmem:[#allocation8 + $0x28] sm:$0xff]
    %v609 = vld [vmem:[#allocation8 + $0x30] sm:$0xff]
    %v610 = vld [vmem:[#allocation8 + $0x38] sm:$0xff]
    %v611 = vld [vmem:[#allocation8 + $0x40] sm:$0xff]
    %v612 = vld [vmem:[#allocation8 + $0x48] sm:$0xff]
    %v613 = vld [vmem:[#allocation8 + $0x50] sm:$0xff]
    %v614 = vld [vmem:[#allocation8 + $0x58] sm:$0xff]
    %v615 = vld [vmem:[#allocation8 + $0x60] sm:$0xff]
    %v616 = vld [vmem:[#allocation8 + $0x68] sm:$0xff]
    %v617 = vld [vmem:[#allocation8 + $0x70] sm:$0xff]
    %v618 = vld [vmem:[#allocation8 + $0x78] sm:$0xff]
    %619 = vmatpush.msra.mxu0 %v618
    %620 = vmatpush.msra.mxu0 %v617
    %621 = vmatpush.msra.mxu0 %v616
    %622 = vmatpush.msra.mxu0 %v615
    %623 = vmatpush.msra.mxu0 %v614
    %624 = vmatpush.msra.mxu0 %v613
    %625 = vmatpush.msra.mxu0 %v612
    %626 = vmatpush.msra.mxu0 %v611
    %627 = vmatpush.msra.mxu0 %v610
    %628 = vmatpush.msra.mxu0 %v609
    %629 = vmatpush.msra.mxu0 %v608
    %630 = vmatpush.msra.mxu0 %v607
    %631 = vmatpush.msra.mxu0 %v606
    %632 = vmatpush.msra.mxu0 %v605
    %633 = vmatpush.msra.mxu0 %v604
    %634 = vmatpush.msra.mxu0 %v603
    %635 = vmatmul.f32.gmra.mxu0 %v561
    %v636 = vpop.f32.mrf.mxu0
    %v637 = vadd.f32 0.0, %v636
    %638 = vdwg.mxu0
    %639 = vmatpush.msra.mxu0 %v602
    %640 = vmatpush.msra.mxu0 %v601
    %641 = vmatpush.msra.mxu0 %v600
    %642 = vmatpush.msra.mxu0 %v599
    %643 = vmatpush.msra.mxu0 %v598
    %644 = vmatpush.msra.mxu0 %v597
    %645 = vmatpush.msra.mxu0 %v596
    %646 = vmatpush.msra.mxu0 %v595
    %647 = vmatpush.msra.mxu0 %v594
    %648 = vmatpush.msra.mxu0 %v593
    %649 = vmatpush.msra.mxu0 %v592
    %650 = vmatpush.msra.mxu0 %v591
    %651 = vmatpush.msra.mxu0 %v590
    %652 = vmatpush.msra.mxu0 %v589
    %653 = vmatpush.msra.mxu0 %v588
    %654 = vmatpush.msra.mxu0 %v587
    %655 = vmatmul.f32.gmra.mxu0 %v586
    %v656 = vpop.f32.mrf.mxu0
    %v657 = vadd.f32 %v637, %v656
    %658 = vdwg.mxu0
    %v659 = vld [vmem:[%s3] sm:$0x1]
    %v661 = vperm.slane %v659, 0
    %v663 = vadd.f32 %v657, %v661
    %v664 = vtanh.pop %v663
    %v666 = vrot.slane %v664, 1
    %v667 = vrot.slane %v664, 2
    %v668 = vrot.slane %v664, 3
    %v669 = vrot.slane %v664, 4
    %v670 = vrot.slane %v664, 5
    %v671 = vrot.slane %v664, 6
    %v672 = vrot.slane %v664, 7
    %680 = vst [vmem:[#allocation9 + $0x5] sm:$0x1] %v664
    %681 = vst [vmem:[#allocation9 + $0xd] sm:$0x1] %v666
    %682 = vst [vmem:[#allocation9 + $0x15] sm:$0x1] %v667
    %683 = vst [vmem:[#allocation9 + $0x1d] sm:$0x1] %v668
    %684 = vst [vmem:[#allocation9 + $0x25] sm:$0x1] %v669
    %685 = vst [vmem:[#allocation9 + $0x2d] sm:$0x1] %v670
    %686 = vst [vmem:[#allocation9 + $0x35] sm:$0x1] %v671
    %687 = vst [vmem:[#allocation9 + $0x3d] sm:$0x1] %v672
    %s688 = scalar_lea.vmem [#allocation3], 48
    %v689 = vld [vmem:[%s688] sm:$0xff]
    %v690 = vld [vmem:[#allocation6] sm:$0xff]
    %v691 = vld [vmem:[#allocation6 + $0x8] sm:$0xff]
    %v692 = vld [vmem:[#allocation6 + $0x10] sm:$0xff]
    %v693 = vld [vmem:[#allocation6 + $0x18] sm:$0xff]
    %v694 = vld [vmem:[#allocation6 + $0x20] sm:$0xff]
    %v695 = vld [vmem:[#allocation6 + $0x28] sm:$0xff]
    %v696 = vld [vmem:[#allocation6 + $0x30] sm:$0xff]
    %v697 = vld [vmem:[#allocation6 + $0x38] sm:$0xff]
    %v698 = vld [vmem:[#allocation6 + $0x40] sm:$0xff]
    %v699 = vld [vmem:[#allocation6 + $0x48] sm:$0xff]
    %v700 = vld [vmem:[#allocation6 + $0x50] sm:$0xff]
    %v701 = vld [vmem:[#allocation6 + $0x58] sm:$0xff]
    %v702 = vld [vmem:[#allocation6 + $0x60] sm:$0xff]
    %v703 = vld [vmem:[#allocation6 + $0x68] sm:$0xff]
    %v704 = vld [vmem:[#allocation6 + $0x70] sm:$0xff]
    %v705 = vld [vmem:[#allocation6 + $0x78] sm:$0xff]
    %v706 = vld [vmem:[#allocation8] sm:$0xff]
    %v707 = vld [vmem:[#allocation8 + $0x8] sm:$0xff]
    %v708 = vld [vmem:[#allocation8 + $0x10] sm:$0xff]
    %v709 = vld [vmem:[#allocation8 + $0x18] sm:$0xff]
    %v710 = vld [vmem:[#allocation8 + $0x20] sm:$0xff]
    %v711 = vld [vmem:[#allocation8 + $0x28] sm:$0xff]
    %v712 = vld [vmem:[#allocation8 + $0x30] sm:$0xff]
    %v713 = vld [vmem:[#allocation8 + $0x38] sm:$0xff]
    %v714 = vld [vmem:[#allocation8 + $0x40] sm:$0xff]
    %v715 = vld [vmem:[#allocation8 + $0x48] sm:$0xff]
    %v716 = vld [vmem:[#allocation8 + $0x50] sm:$0xff]
    %v717 = vld [vmem:[#allocation8 + $0x58] sm:$0xff]
    %v718 = vld [vmem:[#allocation8 + $0x60] sm:$0xff]
    %v719 = vld [vmem:[#allocation8 + $0x68] sm:$0xff]
    %v720 = vld [vmem:[#allocation8 + $0x70] sm:$0xff]
    %v721 = vld [vmem:[#allocation8 + $0x78] sm:$0xff]
    %722 = vmatpush.msra.mxu0 %v721
    %723 = vmatpush.msra.mxu0 %v720
    %724 = vmatpush.msra.mxu0 %v719
    %725 = vmatpush.msra.mxu0 %v718
    %726 = vmatpush.msra.mxu0 %v717
    %727 = vmatpush.msra.mxu0 %v716
    %728 = vmatpush.msra.mxu0 %v715
    %729 = vmatpush.msra.mxu0 %v714
    %730 = vmatpush.msra.mxu0 %v713
    %731 = vmatpush.msra.mxu0 %v712
    %732 = vmatpush.msra.mxu0 %v711
    %733 = vmatpush.msra.mxu0 %v710
    %734 = vmatpush.msra.mxu0 %v709
    %735 = vmatpush.msra.mxu0 %v708
    %736 = vmatpush.msra.mxu0 %v707
    %737 = vmatpush.msra.mxu0 %v706
    %738 = vmatmul.f32.gmra.mxu0 %v664
    %v739 = vpop.f32.mrf.mxu0
    %v740 = vadd.f32 0.0, %v739
    %741 = vdwg.mxu0
    %742 = vmatpush.msra.mxu0 %v705
    %743 = vmatpush.msra.mxu0 %v704
    %744 = vmatpush.msra.mxu0 %v703
    %745 = vmatpush.msra.mxu0 %v702
    %746 = vmatpush.msra.mxu0 %v701
    %747 = vmatpush.msra.mxu0 %v700
    %748 = vmatpush.msra.mxu0 %v699
    %749 = vmatpush.msra.mxu0 %v698
    %750 = vmatpush.msra.mxu0 %v697
    %751 = vmatpush.msra.mxu0 %v696
    %752 = vmatpush.msra.mxu0 %v695
    %753 = vmatpush.msra.mxu0 %v694
    %754 = vmatpush.msra.mxu0 %v693
    %755 = vmatpush.msra.mxu0 %v692
    %756 = vmatpush.msra.mxu0 %v691
    %757 = vmatpush.msra.mxu0 %v690
    %758 = vmatmul.f32.gmra.mxu0 %v689
    %v759 = vpop.f32.mrf.mxu0
    %v760 = vadd.f32 %v740, %v759
    %761 = vdwg.mxu0
    %v762 = vld [vmem:[%s3] sm:$0x1]
    %v764 = vperm.slane %v762, 0
    %v766 = vadd.f32 %v760, %v764
    %v767 = vtanh.pop %v766
    %v769 = vrot.slane %v767, 1
    %v770 = vrot.slane %v767, 2
    %v771 = vrot.slane %v767, 3
    %v772 = vrot.slane %v767, 4
    %v773 = vrot.slane %v767, 5
    %v774 = vrot.slane %v767, 6
    %v775 = vrot.slane %v767, 7
    %783 = vst [vmem:[#allocation9 + $0x6] sm:$0x1] %v767
    %784 = vst [vmem:[#allocation9 + $0xe] sm:$0x1] %v769
    %785 = vst [vmem:[#allocation9 + $0x16] sm:$0x1] %v770
    %786 = vst [vmem:[#allocation9 + $0x1e] sm:$0x1] %v771
    %787 = vst [vmem:[#allocation9 + $0x26] sm:$0x1] %v772
    %788 = vst [vmem:[#allocation9 + $0x2e] sm:$0x1] %v773
    %789 = vst [vmem:[#allocation9 + $0x36] sm:$0x1] %v774
    %790 = vst [vmem:[#allocation9 + $0x3e] sm:$0x1] %v775
    %s791 = scalar_lea.vmem [#allocation3], 56
    %v792 = vld [vmem:[%s791] sm:$0xff]
    %v793 = vld [vmem:[#allocation6] sm:$0xff]
    %v794 = vld [vmem:[#allocation6 + $0x8] sm:$0xff]
    %v795 = vld [vmem:[#allocation6 + $0x10] sm:$0xff]
    %v796 = vld [vmem:[#allocation6 + $0x18] sm:$0xff]
    %v797 = vld [vmem:[#allocation6 + $0x20] sm:$0xff]
    %v798 = vld [vmem:[#allocation6 + $0x28] sm:$0xff]
    %v799 = vld [vmem:[#allocation6 + $0x30] sm:$0xff]
    %v800 = vld [vmem:[#allocation6 + $0x38] sm:$0xff]
    %v801 = vld [vmem:[#allocation6 + $0x40] sm:$0xff]
    %v802 = vld [vmem:[#allocation6 + $0x48] sm:$0xff]
    %v803 = vld [vmem:[#allocation6 + $0x50] sm:$0xff]
    %v804 = vld [vmem:[#allocation6 + $0x58] sm:$0xff]
    %v805 = vld [vmem:[#allocation6 + $0x60] sm:$0xff]
    %v806 = vld [vmem:[#allocation6 + $0x68] sm:$0xff]
    %v807 = vld [vmem:[#allocation6 + $0x70] sm:$0xff]
    %v808 = vld [vmem:[#allocation6 + $0x78] sm:$0xff]
    %v809 = vld [vmem:[#allocation8] sm:$0xff]
    %v810 = vld [vmem:[#allocation8 + $0x8] sm:$0xff]
    %v811 = vld [vmem:[#allocation8 + $0x10] sm:$0xff]
    %v812 = vld [vmem:[#allocation8 + $0x18] sm:$0xff]
    %v813 = vld [vmem:[#allocation8 + $0x20] sm:$0xff]
    %v814 = vld [vmem:[#allocation8 + $0x28] sm:$0xff]
    %v815 = vld [vmem:[#allocation8 + $0x30] sm:$0xff]
    %v816 = vld [vmem:[#allocation8 + $0x38] sm:$0xff]
    %v817 = vld [vmem:[#allocation8 + $0x40] sm:$0xff]
    %v818 = vld [vmem:[#allocation8 + $0x48] sm:$0xff]
    %v819 = vld [vmem:[#allocation8 + $0x50] sm:$0xff]
    %v820 = vld [vmem:[#allocation8 + $0x58] sm:$0xff]
    %v821 = vld [vmem:[#allocation8 + $0x60] sm:$0xff]
    %v822 = vld [vmem:[#allocation8 + $0x68] sm:$0xff]
    %v823 = vld [vmem:[#allocation8 + $0x70] sm:$0xff]
    %v824 = vld [vmem:[#allocation8 + $0x78] sm:$0xff]
    %825 = vmatpush.msra.mxu0 %v824
    %826 = vmatpush.msra.mxu0 %v823
    %827 = vmatpush.msra.mxu0 %v822
    %828 = vmatpush.msra.mxu0 %v821
    %829 = vmatpush.msra.mxu0 %v820
    %830 = vmatpush.msra.mxu0 %v819
    %831 = vmatpush.msra.mxu0 %v818
    %832 = vmatpush.msra.mxu0 %v817
    %833 = vmatpush.msra.mxu0 %v816
    %834 = vmatpush.msra.mxu0 %v815
    %835 = vmatpush.msra.mxu0 %v814
    %836 = vmatpush.msra.mxu0 %v813
    %837 = vmatpush.msra.mxu0 %v812
    %838 = vmatpush.msra.mxu0 %v811
    %839 = vmatpush.msra.mxu0 %v810
    %840 = vmatpush.msra.mxu0 %v809
    %841 = vmatmul.f32.gmra.mxu0 %v767
    %v842 = vpop.f32.mrf.mxu0
    %v843 = vadd.f32 0.0, %v842
    %844 = vdwg.mxu0
    %845 = vmatpush.msra.mxu0 %v808
    %846 = vmatpush.msra.mxu0 %v807
    %847 = vmatpush.msra.mxu0 %v806
    %848 = vmatpush.msra.mxu0 %v805
    %849 = vmatpush.msra.mxu0 %v804
    %850 = vmatpush.msra.mxu0 %v803
    %851 = vmatpush.msra.mxu0 %v802
    %852 = vmatpush.msra.mxu0 %v801
    %853 = vmatpush.msra.mxu0 %v800
    %854 = vmatpush.msra.mxu0 %v799
    %855 = vmatpush.msra.mxu0 %v798
    %856 = vmatpush.msra.mxu0 %v797
    %857 = vmatpush.msra.mxu0 %v796
    %858 = vmatpush.msra.mxu0 %v795
    %859 = vmatpush.msra.mxu0 %v794
    %860 = vmatpush.msra.mxu0 %v793
    %861 = vmatmul.f32.gmra.mxu0 %v792
    %v862 = vpop.f32.mrf.mxu0
    %v863 = vadd.f32 %v843, %v862
    %864 = vdwg.mxu0
    %v865 = vld [vmem:[%s3] sm:$0x1]
    %v867 = vperm.slane %v865, 0
    %v869 = vadd.f32 %v863, %v867
    %v870 = vtanh.pop %v869
    %v872 = vrot.slane %v870, 1
    %v873 = vrot.slane %v870, 2
    %v874 = vrot.slane %v870, 3
    %v875 = vrot.slane %v870, 4
    %v876 = vrot.slane %v870, 5
    %v877 = vrot.slane %v870, 6
    %v878 = vrot.slane %v870, 7
    %886 = vst [vmem:[#allocation9 + $0x7] sm:$0x1] %v870
    %887 = vst [vmem:[#allocation9 + $0xf] sm:$0x1] %v872
    %888 = vst [vmem:[#allocation9 + $0x17] sm:$0x1] %v873
    %889 = vst [vmem:[#allocation9 + $0x1f] sm:$0x1] %v874
    %890 = vst [vmem:[#allocation9 + $0x27] sm:$0x1] %v875
    %891 = vst [vmem:[#allocation9 + $0x2f] sm:$0x1] %v876
    %892 = vst [vmem:[#allocation9 + $0x37] sm:$0x1] %v877
    %893 = vst [vmem:[#allocation9 + $0x3f] sm:$0x1] %v878
    %894 = vst [vmem:[#allocation2] sm:$0xff] %v870
    // Predicated region
    $region34: #{tpu_custom_call.1} parent=1 // pred_check
      _
    $region35: #{tpu_custom_call.1} parent=1 // pred_check_branch
      %896 = sbr.rel (0) target = $region37
    $region36: #{tpu_custom_call.1} parent=1 // pred_region
      %898 = vsyncadd [#allocation5], 0
      %s899 = sshll.u32 [#allocation9], 4
      %s900 = int_to_ptr.vmem [resolvable:$true] %s899
      %s901 = sshll.u32 %s4, 4
      %s902 = int_to_ptr.hbm [resolvable:$true] %s901
      %907 = dma.vmem_to_hbm [thread:$0]  %s900, 1024, %s902, [#allocation5], 128, 128, 8
    $region37: #{tpu_custom_call.1} parent=1 // pred_fallthru
      _
    // Predicated region
    $region38: #{tpu_custom_call.1} parent=1 // pred_check
      _
    $region39: #{tpu_custom_call.1} parent=1 // pred_check_branch
      %909 = sbr.rel (0) target = $region41
    $region40: #{tpu_custom_call.1} parent=1 // pred_region
      %911 = dma.done [#allocation5], 1024
    $region41: #{tpu_custom_call.1} parent=1 // pred_fallthru
      _
    %912 = vsyncpa [#allocation4], 1
    %913 = vsyncpa [#allocation7], 1
    %914 = vsyncpa [#allocation5], 1

</llo_original>
